<compile_context>
chip_gen: v7x
topology: tpu7x:2x2x1
jax: 0.10.0
libtpu: 0.0.40
codegen_flags: <defaults>
</compile_context>

<pallas_src>
import functools

import jax
import jax.numpy as jnp
from jax.experimental import pallas as pl
from jax.experimental.pallas import tpu as pltpu


def _round_up(x, m):
    return ((x + m - 1) // m) * m


# ---------------------------------------------------------------------------
# Kernel: T recurrent ThalNet-module steps fused in one pallas_call.
# ---------------------------------------------------------------------------
def thalnet_seq_kernel(xc_ref, h0_ref, w_in_ref, w_hh_ref, b_ref,
                       h_out_ref, h_scr, *, hidden_pad):
    Hp = hidden_pad
    t = pl.program_id(0)

    # Initialize the carried hidden state once (h0 block is VMEM-resident).
    @pl.when(t == 0)
    def _():
        h_scr[...] = h0_ref[...]

    h = h_scr[...]                       # (B, Hp) f32 carried state
    xc = xc_ref[0]                       # (B, Din) = [inputs_t | center_t]
    mm_dtype = w_in_ref.dtype            # f32 or bf16 matmul operands

    # Fused GRU-input matmul (fc_context + FF layer folded in host-side) and hidden matmul.
    gi = jnp.dot(xc.astype(mm_dtype), w_in_ref[...],
                 preferred_element_type=jnp.float32) + b_ref[0:1, :]      # (B, 3Hp)
    gh = jnp.dot(h.astype(mm_dtype), w_hh_ref[...],
                 preferred_element_type=jnp.float32) + b_ref[1:2, :]      # (B, 3Hp)

    # Gate slices are lane-aligned (offsets 0 / Hp / 2Hp, each a multiple of 128).
    r = jax.nn.sigmoid(gi[:, :Hp] + gh[:, :Hp])
    z = jax.nn.sigmoid(gi[:, Hp:2 * Hp] + gh[:, Hp:2 * Hp])
    n = jnp.tanh(gi[:, 2 * Hp:] + r * gh[:, 2 * Hp:])                     # gh_n includes b_hn
    h_new = (1.0 - z) * n + z * h

    h_scr[...] = h_new
    h_out_ref[0] = h_new                 # full-128-lane unmasked store


# ---------------------------------------------------------------------------
# Host-side one-time precompute: weight-norm, algebraic folding, gate padding.
# ---------------------------------------------------------------------------
def prepare_params(raw, *, input_size, output_size, center_size_per_module,
                   matmul_dtype=jnp.float32):
    H = output_size + center_size_per_module
    Hp = _round_up(max(H, 128), 128)

    # weight_norm (PyTorch dim=0 of the (out,in) weight == per-output-column norm of v^T).
    v = raw["v_ctx_t"]
    w_ctx = v * (raw["g_ctx"] / jnp.sqrt(jnp.sum(v * v, axis=0, keepdims=True)))      # (center, ctx)
    vff = raw["v_ff_t"]
    w_ff = vff * (raw["g_ff"] / jnp.sqrt(jnp.sum(vff * vff, axis=0, keepdims=True)))  # (in+ctx, ff)

    # Fold fc_context into the FF layer (context is never an output -> exact).
    w_ff_x = w_ff[:input_size, :]                                  # (in, ff)
    w_ff_c = w_ctx @ w_ff[input_size:, :]                          # (center, ff)
    b_ff = raw["b_ctx"] @ w_ff[input_size:, :] + raw["b_ff"]       # (1, ff)
    w_xc_ff = jnp.concatenate([w_ff_x, w_ff_c], axis=0)            # (in+center, ff)

    # Fold the FF layer into the GRU input path (non_linearity=='' -> identity -> exact):
    #   gi = ff @ w_ih^T + b_ih = xc @ (w_xc_ff @ w_ih^T) + (b_ff @ w_ih^T + b_ih)
    w_ih_t = raw["w_ih"].T                                         # (ff, 3H) cols [r|z|n]
    w_in = w_xc_ff @ w_ih_t                                        # (in+center, 3H)
    b_i = b_ff @ w_ih_t + raw["b_ih"].reshape(1, 3 * H)            # (1, 3H)
    w_hh = raw["w_hh"].T                                           # (H, 3H)
    b_h = raw["b_hh"].reshape(1, 3 * H)                            # (1, 3H), b_hn stays in gh

    def pad_gates_cols(a):
        # (rows, 3H) -> (rows, 3Hp): each gate block zero-padded H -> Hp (lane aligned).
        rows = a.shape[0]
        out = jnp.zeros((rows, 3 * Hp), jnp.float32)
        for g in range(3):
            out = out.at[:, g * Hp:g * Hp + H].set(a[:, g * H:(g + 1) * H])
        return out

    w_in_p = pad_gates_cols(w_in)                                            # (Din, 3Hp)
    w_hh_p = jnp.zeros((Hp, 3 * Hp), jnp.float32).at[:H, :].set(pad_gates_cols(w_hh))
    bias = jnp.concatenate([pad_gates_cols(b_i), pad_gates_cols(b_h)], 0)    # (2, 3Hp)

    return dict(w_in=w_in_p.astype(matmul_dtype),
                w_hh=w_hh_p.astype(matmul_dtype),
                bias=bias.astype(jnp.float32),
                hidden_size=H, hidden_pad=Hp)


# ---------------------------------------------------------------------------
# Wrappers.
# ---------------------------------------------------------------------------
def thalnet_forward_seq(inputs_seq, center_seq, h0, prepared, *,
                        input_size, output_size, center_size_per_module):
    """T fused ThalNet-module steps: inputs_seq (T,B,in), center_seq (T,B,center), h0 (B,H)."""
    T, B, _ = inputs_seq.shape
    H, Hp = prepared["hidden_size"], prepared["hidden_pad"]
    Din = inputs_seq.shape[-1] + center_seq.shape[-1]

    # Host-side (free XLA) plumbing: one activation slab per step + zero-padded h0.
    xc = jnp.concatenate([inputs_seq, center_seq], axis=-1).astype(jnp.float32)   # (T,B,Din)
    h0_p = jnp.zeros((B, Hp), jnp.float32).at[:, :H].set(h0.astype(jnp.float32))

    kernel = functools.partial(thalnet_seq_kernel, hidden_pad=Hp)
    h_seq_p = pl.pallas_call(
        kernel,
        out_shape=jax.ShapeDtypeStruct((T, B, Hp), jnp.float32),
        grid_spec=pltpu.PrefetchScalarGridSpec(
            num_scalar_prefetch=0,
            grid=(T,),
            in_specs=[
                pl.BlockSpec((1, B, Din), lambda t: (t, 0, 0)),               # per-step activations
                pl.BlockSpec((B, Hp), lambda t: (0, 0)),                      # h0 (resident)
                pl.BlockSpec(prepared["w_in"].shape, lambda t: (0, 0)),       # resident weights
                pl.BlockSpec(prepared["w_hh"].shape, lambda t: (0, 0)),
                pl.BlockSpec(prepared["bias"].shape, lambda t: (0, 0)),
            ],
            out_specs=pl.BlockSpec((1, B, Hp), lambda t: (t, 0, 0)),
            scratch_shapes=[pltpu.VMEM((B, Hp), jnp.float32)],                # carried hidden state
        ),
        compiler_params=pltpu.CompilerParams(
            dimension_semantics=("arbitrary",)),   # t carries state -> must be sequential
    )(xc, h0_p, prepared["w_in"], prepared["w_hh"], prepared["bias"])

    h_seq = h_seq_p[:, :, :H]                       # strip lane padding (free XLA slice)
    outputs = h_seq[:, :, :output_size]
    center_feats = h_seq[:, :, output_size:]
    return outputs, center_feats, h_seq


def thalnet_forward(inputs, prev_center_state, prev_hidden_state, prepared, *,
                    input_size, output_size, center_size_per_module):
    """Module-faithful single step (same signature semantics as ThalnetModule.forward)."""
    if inputs.ndim == 3:            # (B, T, F) -> take t=0, as in the PyTorch module
        inputs = inputs[:, 0, :]
    out_seq, cf_seq, h_seq = thalnet_forward_seq(
        inputs[None], prev_center_state[None], prev_hidden_state, prepared,
        input_size=input_size, output_size=output_size,
        center_size_per_module=center_size_per_module)
    return out_seq[0], cf_seq[0], h_seq[0]


# ---------------------------------------------------------------------------
# Pure-JAX reference (raw weight-norm params, un-folded) and synthetic init.
# ---------------------------------------------------------------------------
def reference_step(x, center, h, raw, *, input_size):
    H = h.shape[1]
    v = raw["v_ctx_t"]
    w_ctx = v * (raw["g_ctx"] / jnp.sqrt(jnp.sum(v * v, axis=0, keepdims=True)))
    context = center @ w_ctx + raw["b_ctx"]
    xcat = jnp.concatenate([x, context], axis=1)
    vff = raw["v_ff_t"]
    wff = vff * (raw["g_ff"] / jnp.sqrt(jnp.sum(vff * vff, axis=0, keepdims=True)))
    ff = xcat @ wff + raw["b_ff"]
    gi = ff @ raw["w_ih"].T + raw["b_ih"]
    gh = h @ raw["w_hh"].T + raw["b_hh"]
    r = jax.nn.sigmoid(gi[:, :H] + gh[:, :H])
    z = jax.nn.sigmoid(gi[:, H:2 * H] + gh[:, H:2 * H])
    n = jnp.tanh(gi[:, 2 * H:] + r * gh[:, 2 * H:])
    return (1.0 - z) * n + z * h


def init_raw_params(key, *, center_size, context_size, center_size_per_module,
                    input_size, output_size):
    """Deterministic synthetic parameters matching the module's shapes (PyTorch layout)."""
    input_ctx = input_size + context_size
    H = output_size + center_size_per_module
    ff_out = center_size_per_module
    keys = jax.random.split(key, 8)

    def unif(k, shape, fan_in):
        bound = 1.0 / jnp.sqrt(jnp.float32(fan_in))
        return jax.random.uniform(k, shape, jnp.float32, -bound, bound)

    v_ctx_t = unif(keys[0], (center_size, context_size), center_size)
    g_ctx = jnp.sqrt(jnp.sum(v_ctx_t * v_ctx_t, axis=0, keepdims=True))   # PyTorch init: g = ||v||
    b_ctx = unif(keys[1], (1, context_size), center_size)

    v_ff_t = unif(keys[2], (input_ctx, ff_out), input_ctx)
    g_ff = jnp.sqrt(jnp.sum(v_ff_t * v_ff_t, axis=0, keepdims=True))
    b_ff = unif(keys[3], (1, ff_out), input_ctx)

    w_ih = unif(keys[4], (3 * H, ff_out), H)
    w_hh = unif(keys[5], (3 * H, H), H)
    b_ih = unif(keys[6], (3 * H,), H)
    b_hh = unif(keys[7], (3 * H,), H)

    return dict(v_ctx_t=v_ctx_t, g_ctx=g_ctx, b_ctx=b_ctx,
                v_ff_t=v_ff_t, g_ff=g_ff, b_ff=b_ff,
                w_ih=w_ih, w_hh=w_hh, b_ih=b_ih, b_hh=b_hh)


if __name__ == "__main__":
    B, T = 2, 8
    center_size = 64
    context_size = 32
    center_size_per_module = 32
    input_size = 16
    output_size = 8
    H = output_size + center_size_per_module   # controller hidden = 40

    key = jax.random.PRNGKey(0)
    k_in, k_c, k_p = jax.random.split(key, 3)
    inputs_seq = jax.random.normal(k_in, (T, B, input_size), jnp.float32)
    center_seq = jax.random.normal(k_c, (T, B, center_size), jnp.float32)
    h0 = jnp.zeros((B, H), jnp.float32)         # controller.init_state -> zeros

    raw = init_raw_params(k_p, center_size=center_size, context_size=context_size,
                          center_size_per_module=center_size_per_module,
                          input_size=input_size, output_size=output_size)

    # ---- f32 path: T steps fused in one kernel call ----
    prepared = prepare_params(raw, input_size=input_size, output_size=output_size,
                              center_size_per_module=center_size_per_module,
                              matmul_dtype=jnp.float32)
    out_seq, cf_seq, h_seq = thalnet_forward_seq(
        inputs_seq, center_seq, h0, prepared,
        input_size=input_size, output_size=output_size,
        center_size_per_module=center_size_per_module)
    jax.block_until_ready((out_seq, cf_seq, h_seq))

    # Reference: loop the per-step reference T times.
    h = h0
    ref_hs = []
    for t in range(T):
        h = reference_step(inputs_seq[t], center_seq[t], h, raw, input_size=input_size)
        ref_hs.append(h)
    ref_hs = jnp.stack(ref_hs)

    assert out_seq.shape == (T, B, output_size)
    assert cf_seq.shape == (T, B, center_size_per_module)
    assert h_seq.shape == (T, B, H)
    assert jnp.allclose(h_seq, ref_hs, rtol=1e-2, atol=1e-2)
    assert jnp.allclose(out_seq, ref_hs[:, :, :output_size], rtol=1e-2, atol=1e-2)
    assert jnp.allclose(cf_seq, ref_hs[:, :, output_size:], rtol=1e-2, atol=1e-2)

    # ---- module-faithful single-step wrapper (exercise (B, T, F) input handling) ----
    inputs_bt = jnp.transpose(inputs_seq, (1, 0, 2))       # (B, T, in); module takes [:, 0, :]
    out1, cf1, h1 = thalnet_forward(
        inputs_bt, center_seq[0], h0, prepared,
        input_size=input_size, output_size=output_size,
        center_size_per_module=center_size_per_module)
    jax.block_until_ready(h1)
    assert out1.shape == (B, output_size) and cf1.shape == (B, center_size_per_module)
    assert jnp.allclose(h1, ref_hs[0], rtol=1e-2, atol=1e-2)

    # ---- bf16 matmul-operand path (v6e/v7x tip; elementwise gate math stays f32) ----
    prepared_bf16 = prepare_params(raw, input_size=input_size, output_size=output_size,
                                   center_size_per_module=center_size_per_module,
                                   matmul_dtype=jnp.bfloat16)
    _, _, h_seq_bf16 = thalnet_forward_seq(
        inputs_seq, center_seq, h0, prepared_bf16,
        input_size=input_size, output_size=output_size,
        center_size_per_module=center_size_per_module)
    jax.block_until_ready(h_seq_bf16)
    assert jnp.allclose(h_seq_bf16, ref_hs, rtol=5e-2, atol=5e-2)

    print("KERNEL_OK")
</pallas_src>

<mosaic_0001>
module attributes {stable_mosaic.version = 11 : i64} {
  func.func @thalnet_seq_kernel(%arg0: i32, %arg1: memref<1x2x80xf32, #tpu.memory_space<vmem>>, %arg2: memref<2x128xf32, #tpu.memory_space<vmem>>, %arg3: memref<80x384xf32, #tpu.memory_space<vmem>>, %arg4: memref<128x384xf32, #tpu.memory_space<vmem>>, %arg5: memref<2x384xf32, #tpu.memory_space<vmem>>, %arg6: memref<1x2x128xf32, #tpu.memory_space<vmem>>, %arg7: memref<2x128xf32, #tpu.memory_space<vmem>>) attributes {dimension_semantics = [#tpu.dimension_semantics<arbitrary>], iteration_bounds = array<i64: 8>, scalar_prefetch = 0 : i64, scratch_operands = 1 : i64, tpu.core_type = #tpu.core_type<tc>, window_params = [{transform_indices = @transform_0, window_bounds = array<i64: 1, 2, 80>}, {pipeline_mode = #tpu.pipeline_mode<synchronous>, transform_indices = @transform_1, window_bounds = array<i64: 2, 128>}, {pipeline_mode = #tpu.pipeline_mode<synchronous>, transform_indices = @transform_2, window_bounds = array<i64: 80, 384>}, {pipeline_mode = #tpu.pipeline_mode<synchronous>, transform_indices = @transform_3, window_bounds = array<i64: 128, 384>}, {pipeline_mode = #tpu.pipeline_mode<synchronous>, transform_indices = @transform_4, window_bounds = array<i64: 2, 384>}, {transform_indices = @transform_5, window_bounds = array<i64: 1, 2, 128>}]} {
    %c0_i32 = arith.constant 0 : i32
    %0 = arith.cmpi eq, %arg0, %c0_i32 : i32
    %1 = arith.extui %0 : i1 to i32
    %c0_i32_0 = arith.constant 0 : i32
    %2 = arith.cmpi ne, %1, %c0_i32_0 : i32
    scf.if %2 {
      %c0_21 = arith.constant 0 : index
      %c0_22 = arith.constant 0 : index
      %46 = vector.load %arg2[%c0_21, %c0_22] : memref<2x128xf32, #tpu.memory_space<vmem>>, vector<2x128xf32>
      %c0_23 = arith.constant 0 : index
      %c0_24 = arith.constant 0 : index
      %47 = vector.load %arg7[%c0_23, %c0_24] : memref<2x128xf32, #tpu.memory_space<vmem>>, vector<2x128xf32>
      tpu.vector_store %arg7[%c0_23, %c0_24], %46 {strides = array<i32>} : memref<2x128xf32, #tpu.memory_space<vmem>>, vector<2x128xf32>,
    } else {
    }
    %c0 = arith.constant 0 : index
    %c0_1 = arith.constant 0 : index
    %3 = vector.load %arg7[%c0, %c0_1] : memref<2x128xf32, #tpu.memory_space<vmem>>, vector<2x128xf32>
    %c0_2 = arith.constant 0 : index
    %c0_3 = arith.constant 0 : index
    %c0_4 = arith.constant 0 : index
    %4 = vector.load %arg1[%c0_2, %c0_3, %c0_4] : memref<1x2x80xf32, #tpu.memory_space<vmem>>, vector<1x2x80xf32>
    %5 = vector.shape_cast %4 : vector<1x2x80xf32> to vector<2x80xf32>
    %c0_5 = arith.constant 0 : index
    %c0_6 = arith.constant 0 : index
    %6 = vector.load %arg3[%c0_5, %c0_6] : memref<80x384xf32, #tpu.memory_space<vmem>>, vector<80x384xf32>
    %cst = arith.constant dense<0.000000e+00> : vector<2x384xf32>
    %7 = tpu.matmul %5, %6, %cst {dimension_numbers = #tpu.dot_dimension_numbers<[1], [0], [0], [1], [0, 0, 1, 1], [], []>} : vector<2x80xf32>, vector<80x384xf32>, vector<2x384xf32> -> vector<2x384xf32>
    %c0_7 = arith.constant 0 : index
    %c0_8 = arith.constant 0 : index
    %8 = vector.load %arg5[%c0_7, %c0_8] : memref<2x384xf32, #tpu.memory_space<vmem>>, vector<1x384xf32>
    %9 = vector.broadcast %8 : vector<1x384xf32> to vector<2x384xf32>
    %10 = arith.addf %7, %9 : vector<2x384xf32>
    %c0_9 = arith.constant 0 : index
    %c0_10 = arith.constant 0 : index
    %11 = vector.load %arg4[%c0_9, %c0_10] : memref<128x384xf32, #tpu.memory_space<vmem>>, vector<128x384xf32>
    %cst_11 = arith.constant dense<0.000000e+00> : vector<2x384xf32>
    %12 = tpu.matmul %3, %11, %cst_11 {dimension_numbers = #tpu.dot_dimension_numbers<[1], [0], [0], [1], [0, 0, 1, 1], [], []>} : vector<2x128xf32>, vector<128x384xf32>, vector<2x384xf32> -> vector<2x384xf32>
    %c1 = arith.constant 1 : index
    %c0_12 = arith.constant 0 : index
    %13 = vector.load %arg5[%c1, %c0_12] : memref<2x384xf32, #tpu.memory_space<vmem>>, vector<1x384xf32>
    %14 = vector.broadcast %13 : vector<1x384xf32> to vector<2x384xf32>
    %15 = arith.addf %12, %14 : vector<2x384xf32>
    %16 = vector.extract_strided_slice %10 {offsets = [0, 0], sizes = [2, 128], strides = [1, 1]} : vector<2x384xf32> to vector<2x128xf32>
    %17 = vector.extract_strided_slice %15 {offsets = [0, 0], sizes = [2, 128], strides = [1, 1]} : vector<2x384xf32> to vector<2x128xf32>
    %18 = arith.addf %16, %17 : vector<2x128xf32>
    %19 = arith.negf %18 : vector<2x128xf32>
    %20 = math.exp %19 : vector<2x128xf32>
    %cst_13 = arith.constant 1.000000e+00 : f32
    %21 = vector.broadcast %cst_13 : f32 to vector<2x128xf32>
    %22 = arith.addf %21, %20 : vector<2x128xf32>
    %23 = arith.divf %21, %22 : vector<2x128xf32>
    %24 = vector.extract_strided_slice %10 {offsets = [0, 128], sizes = [2, 128], strides = [1, 1]} : vector<2x384xf32> to vector<2x128xf32>
    %25 = vector.extract_strided_slice %15 {offsets = [0, 128], sizes = [2, 128], strides = [1, 1]} : vector<2x384xf32> to vector<2x128xf32>
    %26 = arith.addf %24, %25 : vector<2x128xf32>
    %27 = arith.negf %26 : vector<2x128xf32>
    %28 = math.exp %27 : vector<2x128xf32>
    %cst_14 = arith.constant 1.000000e+00 : f32
    %29 = vector.broadcast %cst_14 : f32 to vector<2x128xf32>
    %30 = arith.addf %29, %28 : vector<2x128xf32>
    %31 = arith.divf %29, %30 : vector<2x128xf32>
    %32 = vector.extract_strided_slice %10 {offsets = [0, 256], sizes = [2, 128], strides = [1, 1]} : vector<2x384xf32> to vector<2x128xf32>
    %33 = vector.extract_strided_slice %15 {offsets = [0, 256], sizes = [2, 128], strides = [1, 1]} : vector<2x384xf32> to vector<2x128xf32>
    %34 = arith.mulf %23, %33 : vector<2x128xf32>
    %35 = arith.addf %32, %34 : vector<2x128xf32>
    %36 = math.tanh %35 : vector<2x128xf32>
    %cst_15 = arith.constant 1.000000e+00 : f32
    %37 = vector.broadcast %cst_15 : f32 to vector<2x128xf32>
    %38 = arith.subf %37, %31 : vector<2x128xf32>
    %39 = arith.mulf %38, %36 : vector<2x128xf32>
    %40 = arith.mulf %31, %3 : vector<2x128xf32>
    %41 = arith.addf %39, %40 : vector<2x128xf32>
    %c0_16 = arith.constant 0 : index
    %c0_17 = arith.constant 0 : index
    %42 = vector.load %arg7[%c0_16, %c0_17] : memref<2x128xf32, #tpu.memory_space<vmem>>, vector<2x128xf32>
    tpu.vector_store %arg7[%c0_16, %c0_17], %41 {strides = array<i32>} : memref<2x128xf32, #tpu.memory_space<vmem>>, vector<2x128xf32>,
    %c0_18 = arith.constant 0 : index
    %c0_19 = arith.constant 0 : index
    %c0_20 = arith.constant 0 : index
    %43 = vector.load %arg6[%c0_18, %c0_19, %c0_20] : memref<1x2x128xf32, #tpu.memory_space<vmem>>, vector<1x2x128xf32>
    %44 = vector.shape_cast %43 : vector<1x2x128xf32> to vector<2x128xf32>
    %45 = vector.shape_cast %41 : vector<2x128xf32> to vector<1x2x128xf32>
    tpu.vector_store %arg6[%c0_18, %c0_19, %c0_20], %45 {strides = array<i32>} : memref<1x2x128xf32, #tpu.memory_space<vmem>>, vector<1x2x128xf32>,
    return
  }
  func.func @transform_0(%arg0: i32) -> (i32, i32, i32) {
    %c0_i32 = arith.constant 0 : i32
    %c0_i32_0 = arith.constant 0 : i32
    %c0_i32_1 = arith.constant 0 : i32
    return %arg0, %c0_i32, %c0_i32_0 : i32, i32, i32
  }
  func.func @transform_1(%arg0: i32) -> (i32, i32) {
    %c0_i32 = arith.constant 0 : i32
    %c0_i32_0 = arith.constant 0 : i32
    %c0_i32_1 = arith.constant 0 : i32
    return %c0_i32, %c0_i32_0 : i32, i32
  }
  func.func @transform_2(%arg0: i32) -> (i32, i32) {
    %c0_i32 = arith.constant 0 : i32
    %c0_i32_0 = arith.constant 0 : i32
    %c0_i32_1 = arith.constant 0 : i32
    return %c0_i32, %c0_i32_0 : i32, i32
  }
  func.func @transform_3(%arg0: i32) -> (i32, i32) {
    %c0_i32 = arith.constant 0 : i32
    %c0_i32_0 = arith.constant 0 : i32
    %c0_i32_1 = arith.constant 0 : i32
    return %c0_i32, %c0_i32_0 : i32, i32
  }
  func.func @transform_4(%arg0: i32) -> (i32, i32) {
    %c0_i32 = arith.constant 0 : i32
    %c0_i32_0 = arith.constant 0 : i32
    %c0_i32_1 = arith.constant 0 : i32
    return %c0_i32, %c0_i32_0 : i32, i32
  }
  func.func @transform_5(%arg0: i32) -> (i32, i32, i32) {
    %c0_i32 = arith.constant 0 : i32
    %c0_i32_0 = arith.constant 0 : i32
    %c0_i32_1 = arith.constant 0 : i32
    return %arg0, %c0_i32, %c0_i32_0 : i32, i32, i32
  }
}

</mosaic_0001>

<llo_original>
// kernel: tpu_custom_call.1
$region0: #{tpu_custom_call.1}
  #allocation0 [shape = 'u32[]', space=smem, size = 0x4, offset = 0x4, fixed_abs, tag = 'smem constant byte address 0x4 - core index']
  #allocation1 [shape = 'u32[144,128]{1,0:T(1,128)}', space=vmem, size = 0x12000, scoped, tag = 'internal scratch']
  #allocation2 [shape = 'f32[2,128]{1,0:T(2,128)}', space=vmem, size = 0x400, scoped, tag = 'scratch operand']
  %s0 = inlined_call_operand.hbm [shape: f32[8,2,80], index: 0, kind: input, shape index: {}]
  %s1 = inlined_call_operand.vmem [shape: f32[2,128], index: 1, kind: input, shape index: {}]
  %s2 = inlined_call_operand.hbm [shape: f32[80,384], index: 2, kind: input, shape index: {}]
  %s3 = inlined_call_operand.hbm [shape: f32[128,384], index: 3, kind: input, shape index: {}]
  %s4 = inlined_call_operand.vmem [shape: f32[2,384], index: 4, kind: input, shape index: {}]
  %s5 = inlined_call_operand.hbm [shape: f32[8,2,128], index: 5, kind: output, shape index: {}]
  %s6 = sld [smem:[#allocation0]]
  $region69: #{tpu_custom_call.1} parent=0
    _
  %s8 = ssub.s32 1, %s6
  %s9 = scalar_select 0, %s8, %s6
  $region1: #{tpu_custom_call.1} parent=0
    #allocation3 [shape = 'u8[2048]{0}', space=vmem, size = 0x800, scoped, tag = 'input window, operand 0']
    #allocation4 [shape = 's32[2]{0}', space=sflag, size = 0x8, scoped, tag = 'scoped memory for tpu_custom_call.1']
    #allocation5 [shape = 's32[2]{0}', space=sflag, size = 0x8, scoped, tag = 'scoped memory for tpu_custom_call.1']
    #allocation6 [shape = 'u8[122880]{0}', space=vmem, size = 0x1e000, scoped, tag = 'input window, operand 2, single buffered']
    #allocation7 [shape = 's32[1]{0}', space=sflag, size = 0x4, scoped, tag = 'scoped memory for tpu_custom_call.1']
    #allocation8 [shape = 'u8[196608]{0}', space=vmem, size = 0x30000, scoped, tag = 'input window, operand 3, single buffered']
    #allocation9 [shape = 'u8[2048]{0}', space=vmem, size = 0x800, scoped, tag = 'output window, operand 0']
    %10 = vsyncpa [#allocation4], 0
    %s11 = scalar_lea.sflag [#allocation4], 1
    %12 = vsyncpa %s11, 0
    %13 = vsyncpa [#allocation7], 0
    %14 = vsyncpa [#allocation5], 0
    %s15 = scalar_lea.sflag [#allocation5], 1
    %16 = vsyncpa %s15, 0
    loop: start=0, step=1, limit=10
    $region2: #{tpu_custom_call.1} parent=1 // loop_pre_header
      _
    $region3: #{tpu_custom_call.1} parent=1 // loop_header
      %s18 = sphi 0, %s22
      %p19 = scmp.ge.s32.totalorder %s18, 10
      %s28 = sphi 0, %s30
      %s31 = sphi 0, %s28
      %s32 = sphi 0, %s31
      %s48 = sphi 0, %s32
      %s52 = sphi 0, %s52
      %s54 = sphi 0, %s52
      %s55 = sphi 0, %s54
      %s69 = sphi 0, %s55
      %s73 = sphi 0, %s73
      %s75 = sphi 0, %s73
      %s76 = sphi 0, %s75
      %s90 = sphi 0, %s76
      %s94 = sphi 0, %s94
      %s96 = sphi 0, %s94
      %s97 = sphi 0, %s96
      %s111 = sphi 0, %s97
      %s115 = sphi 0, %s115
      %s117 = sphi 0, %s115
      %s118 = sphi 0, %s117
      %s132 = sphi 0, %s118
      %s138 = sphi 0, %s140
      %s141 = sphi 0, %s138
      %s142 = sphi 0, %s141
      %s158 = sphi 0, %s142
    $region4: #{tpu_custom_call.1} parent=1 // loop_header_branch
      %21 = sbr.rel (%p19) target = $region8
    $region5: #{tpu_custom_call.1} parent=1 // loop_body
      %s23 = ssub.s32 %s18, 1
      %s24 = ssub.s32 %s18, 2
      %s25 = sadd.s32 %s18, 1
      %s26 = ssub.s32 %s18, %s25
      %p27 = scmp.eq.s32.totalorder %s26, 0
      %s29 = sadd.s32 %s28, 1
      %s30 = scalar_select %p27, %s28, %s29
      %p33 = pneg %p27
      %p34 = scmp.eq.s32.totalorder %s18, 7
      %p35 = por %p33, %p34
      %p36 = scmp.ne.s32.totalorder %s28, %s31
      %p37 = scmp.eq.s32.totalorder %s18, 0
      %p38 = por %p36, %p37
      %p39 = scmp.ne.s32.totalorder %s28, %s31
      %p40 = scmp.eq.s32.totalorder %s23, 7
      %p41 = por %p39, %p40
      %p42 = scmp.ne.s32.totalorder %s31, %s32
      %p43 = scmp.eq.s32.totalorder %s23, 0
      %p44 = por %p42, %p43
      %p45 = scmp.ne.s32.totalorder %s31, %s32
      %p46 = scmp.eq.s32.totalorder %s24, 7
      %p47 = por %p45, %p46
      %p49 = scmp.ne.s32.totalorder %s32, %s48
      %p50 = scmp.eq.s32.totalorder %s24, 0
      %p51 = por %p49, %p50
      %s53 = sadd.s32 %s52, 1
      %p56 = scmp.eq.s32.totalorder %s18, 7
      %p57 = scmp.ne.s32.totalorder %s52, %s54
      %p58 = scmp.eq.s32.totalorder %s18, 0
      %p59 = por %p57, %p58
      %p60 = scmp.ne.s32.totalorder %s52, %s54
      %p61 = scmp.eq.s32.totalorder %s23, 7
      %p62 = por %p60, %p61
      %p63 = scmp.ne.s32.totalorder %s54, %s55
      %p64 = scmp.eq.s32.totalorder %s23, 0
      %p65 = por %p63, %p64
      %p66 = scmp.ne.s32.totalorder %s54, %s55
      %p67 = scmp.eq.s32.totalorder %s24, 7
      %p68 = por %p66, %p67
      %p70 = scmp.ne.s32.totalorder %s55, %s69
      %p71 = scmp.eq.s32.totalorder %s24, 0
      %p72 = por %p70, %p71
      %s74 = sadd.s32 %s73, 1
      %p77 = scmp.eq.s32.totalorder %s18, 7
      %p78 = scmp.ne.s32.totalorder %s73, %s75
      %p79 = scmp.eq.s32.totalorder %s18, 0
      %p80 = por %p78, %p79
      %p81 = scmp.ne.s32.totalorder %s73, %s75
      %p82 = scmp.eq.s32.totalorder %s23, 7
      %p83 = por %p81, %p82
      %p84 = scmp.ne.s32.totalorder %s75, %s76
      %p85 = scmp.eq.s32.totalorder %s23, 0
      %p86 = por %p84, %p85
      %p87 = scmp.ne.s32.totalorder %s75, %s76
      %p88 = scmp.eq.s32.totalorder %s24, 7
      %p89 = por %p87, %p88
      %p91 = scmp.ne.s32.totalorder %s76, %s90
      %p92 = scmp.eq.s32.totalorder %s24, 0
      %p93 = por %p91, %p92
      %s95 = sadd.s32 %s94, 1
      %p98 = scmp.eq.s32.totalorder %s18, 7
      %p99 = scmp.ne.s32.totalorder %s94, %s96
      %p100 = scmp.eq.s32.totalorder %s18, 0
      %p101 = por %p99, %p100
      %p102 = scmp.ne.s32.totalorder %s94, %s96
      %p103 = scmp.eq.s32.totalorder %s23, 7
      %p104 = por %p102, %p103
      %p105 = scmp.ne.s32.totalorder %s96, %s97
      %p106 = scmp.eq.s32.totalorder %s23, 0
      %p107 = por %p105, %p106
      %p108 = scmp.ne.s32.totalorder %s96, %s97
      %p109 = scmp.eq.s32.totalorder %s24, 7
      %p110 = por %p108, %p109
      %p112 = scmp.ne.s32.totalorder %s97, %s111
      %p113 = scmp.eq.s32.totalorder %s24, 0
      %p114 = por %p112, %p113
      %s116 = sadd.s32 %s115, 1
      %p119 = scmp.eq.s32.totalorder %s18, 7
      %p120 = scmp.ne.s32.totalorder %s115, %s117
      %p121 = scmp.eq.s32.totalorder %s18, 0
      %p122 = por %p120, %p121
      %p123 = scmp.ne.s32.totalorder %s115, %s117
      %p124 = scmp.eq.s32.totalorder %s23, 7
      %p125 = por %p123, %p124
      %p126 = scmp.ne.s32.totalorder %s117, %s118
      %p127 = scmp.eq.s32.totalorder %s23, 0
      %p128 = por %p126, %p127
      %p129 = scmp.ne.s32.totalorder %s117, %s118
      %p130 = scmp.eq.s32.totalorder %s24, 7
      %p131 = por %p129, %p130
      %p133 = scmp.ne.s32.totalorder %s118, %s132
      %p134 = scmp.eq.s32.totalorder %s24, 0
      %p135 = por %p133, %p134
      %s136 = ssub.s32 %s18, %s25
      %p137 = scmp.eq.s32.totalorder %s136, 0
      %s139 = sadd.s32 %s138, 1
      %s140 = scalar_select %p137, %s138, %s139
      %p143 = pneg %p137
      %p144 = scmp.eq.s32.totalorder %s18, 7
      %p145 = por %p143, %p144
      %p146 = scmp.ne.s32.totalorder %s138, %s141
      %p147 = scmp.eq.s32.totalorder %s18, 0
      %p148 = por %p146, %p147
      %p149 = scmp.ne.s32.totalorder %s138, %s141
      %p150 = scmp.eq.s32.totalorder %s23, 7
      %p151 = por %p149, %p150
      %p152 = scmp.ne.s32.totalorder %s141, %s142
      %p153 = scmp.eq.s32.totalorder %s23, 0
      %p154 = por %p152, %p153
      %p155 = scmp.ne.s32.totalorder %s141, %s142
      %p156 = scmp.eq.s32.totalorder %s24, 7
      %p157 = por %p155, %p156
      %p159 = scmp.ne.s32.totalorder %s142, %s158
      %p160 = scmp.eq.s32.totalorder %s24, 0
      %p161 = por %p159, %p160
      %p162 = scmp.le.s32.totalorder 1, %s18
      %p163 = scmp.lt.s32.totalorder %s18, 9
      %p164 = pnand %p162, %p163
      %p165 = pneg %p164
      // Predicated region
      $region9: #{tpu_custom_call.1} parent=5 // pred_check
        _
      $region10: #{tpu_custom_call.1} parent=5 // pred_check_branch
        %167 = sbr.rel (%p164) target = $region12
      $region11: #{tpu_custom_call.1} parent=5 // pred_region
        %s168 = ssub.s32 %s18, 1
        // Predicated region
        $region13: #{tpu_custom_call.1} parent=11 // pred_check
          %p169 = pneg %p65
        $region14: #{tpu_custom_call.1} parent=11 // pred_check_branch
          %171 = sbr.rel (%p169) target = $region16
        $region15: #{tpu_custom_call.1} parent=11 // pred_region
          _
        $region16: #{tpu_custom_call.1} parent=11 // pred_fallthru
          _
        // Predicated region
        $region17: #{tpu_custom_call.1} parent=11 // pred_check
          %p172 = pneg %p86
        $region18: #{tpu_custom_call.1} parent=11 // pred_check_branch
          %174 = sbr.rel (%p172) target = $region20
        $region19: #{tpu_custom_call.1} parent=11 // pred_region
          %s176 = ssub.s32 3840, 3840
          %177 = vsyncadd [#allocation7], %s176
          %s178 = sshll.u32 [#allocation6], 4
          %s179 = int_to_ptr.vmem [resolvable:$true] %s178
          %184 = dma.hbm_to_vmem [thread:$0]  %s2, 3840, %s179, [#allocation7], 384, 384, 24
        $region20: #{tpu_custom_call.1} parent=11 // pred_fallthru
          _
        // Predicated region
        $region21: #{tpu_custom_call.1} parent=11 // pred_check
          %p185 = pneg %p107
        $region22: #{tpu_custom_call.1} parent=11 // pred_check_branch
          %187 = sbr.rel (%p185) target = $region24
        $region23: #{tpu_custom_call.1} parent=11 // pred_region
          %s189 = ssub.s32 6144, 6144
          %190 = vsyncadd [#allocation7], %s189
          %s191 = sshll.u32 [#allocation8], 4
          %s192 = int_to_ptr.vmem [resolvable:$true] %s191
          %197 = dma.hbm_to_vmem [thread:$0]  %s3, 6144, %s192, [#allocation7], 384, 384, 24
        $region24: #{tpu_custom_call.1} parent=11 // pred_fallthru
          _
        // Predicated region
        $region25: #{tpu_custom_call.1} parent=11 // pred_check
          %p198 = pneg %p128
        $region26: #{tpu_custom_call.1} parent=11 // pred_check_branch
          %200 = sbr.rel (%p198) target = $region28
        $region27: #{tpu_custom_call.1} parent=11 // pred_region
          _
        $region28: #{tpu_custom_call.1} parent=11 // pred_fallthru
          _
      $region12: #{tpu_custom_call.1} parent=5 // pred_fallthru
        _
      %p201 = scmp.lt.s32.totalorder %s18, 8
      // Predicated region
      $region29: #{tpu_custom_call.1} parent=5 // pred_check
        %p202 = pneg %p201
      $region30: #{tpu_custom_call.1} parent=5 // pred_check_branch
        %204 = sbr.rel (%p202) target = $region32
      $region31: #{tpu_custom_call.1} parent=5 // pred_region
        // Predicated region
        $region33: #{tpu_custom_call.1} parent=31 // pred_check
          %p205 = pneg %p38
        $region34: #{tpu_custom_call.1} parent=31 // pred_check_branch
          %207 = sbr.rel (%p205) target = $region36
        $region35: #{tpu_custom_call.1} parent=31 // pred_region
          %s208 = sand.u32 %s28, 1
          %s209 = scalar_lea.sflag [#allocation4], %s208
          %s210 = sand.u32 %s28, 1
          %s211 = smul.addr %s210, 2
          %s212 = scalar_lea.vmem [#allocation3], %s211
          %s214 = ssub.s32 32, 32
          %215 = vsyncadd %s209, %s214
          %s216 = smul.addr %s18, 32
          %s217 = scalar_lea.hbm %s0, %s216
          %s219 = sshll.u32 %s212, 4
          %s220 = int_to_ptr.vmem [resolvable:$true] %s219
          %222 = dma.hbm_to_vmem [thread:$0]  %s217, 32, %s220, %s209
        $region36: #{tpu_custom_call.1} parent=31 // pred_fallthru
          _
      $region32: #{tpu_custom_call.1} parent=5 // pred_fallthru
        _
      %p223 = scmp.le.s32.totalorder 1, %s18
      %p224 = scmp.lt.s32.totalorder %s18, 9
      %p225 = pnand %p223, %p224
      %p226 = pneg %p225
      // Predicated region
      $region37: #{tpu_custom_call.1} parent=5 // pred_check
        _
      $region38: #{tpu_custom_call.1} parent=5 // pred_check_branch
        %228 = sbr.rel (%p225) target = $region40
      $region39: #{tpu_custom_call.1} parent=5 // pred_region
        %s229 = ssub.s32 %s18, 1
        %s230 = sand.u32 %s31, 1
        %s231 = scalar_lea.sflag [#allocation4], %s230
        %s232 = sand.u32 %s31, 1
        %s233 = smul.addr %s232, 2
        %s234 = scalar_lea.vmem [#allocation3], %s233
        // Predicated region
        $region41: #{tpu_custom_call.1} parent=39 // pred_check
          %p235 = pneg %p44
        $region42: #{tpu_custom_call.1} parent=39 // pred_check_branch
          %237 = sbr.rel (%p235) target = $region44
        $region43: #{tpu_custom_call.1} parent=39 // pred_region
          %238 = dma.done %s231, 32
        $region44: #{tpu_custom_call.1} parent=39 // pred_fallthru
          _
        // Predicated region
        $region45: #{tpu_custom_call.1} parent=39 // pred_check
          %p239 = pneg %p86
        $region46: #{tpu_custom_call.1} parent=39 // pred_check_branch
          %241 = sbr.rel (%p239) target = $region48
        $region47: #{tpu_custom_call.1} parent=39 // pred_region
          %242 = dma.done [#allocation7], 3840
        $region48: #{tpu_custom_call.1} parent=39 // pred_fallthru
          _
        // Predicated region
        $region49: #{tpu_custom_call.1} parent=39 // pred_check
          %p243 = pneg %p107
        $region50: #{tpu_custom_call.1} parent=39 // pred_check_branch
          %245 = sbr.rel (%p243) target = $region52
        $region51: #{tpu_custom_call.1} parent=39 // pred_region
          %246 = dma.done [#allocation7], 6144
        $region52: #{tpu_custom_call.1} parent=39 // pred_fallthru
          _
        %s247 = sand.u32 %s31, 1
        %s248 = scalar_lea.sflag [#allocation4], %s247
        %s249 = sand.u32 %s31, 1
        %s250 = smul.addr %s249, 2
        %s251 = scalar_lea.vmem [#allocation3], %s250
        %p252 = pneg %p44
        %p253 = pneg %p41
        %p254 = pneg %p65
        %p255 = pneg %p62
        %p256 = pneg %p86
        %p257 = pneg %p83
        %p258 = pneg %p107
        %p259 = pneg %p104
        %p260 = pneg %p128
        %p261 = pneg %p125
        %p262 = pneg %p154
        %p263 = pneg %p151
        %s264 = sand.u32 %s141, 1
        %s265 = scalar_lea.sflag [#allocation5], %s264
        %s266 = sand.u32 %s141, 1
        %s267 = smul.addr %s266, 2
        %s268 = scalar_lea.vmem [#allocation9], %s267
        %p269 = scmp.eq.s32.totalorder %s23, 0
        // Predicated region
        $region53: #{tpu_custom_call.1} parent=39 // pred_check
          %p270 = pneg %p269
        $region54: #{tpu_custom_call.1} parent=39 // pred_check_branch
          %272 = sbr.rel (%p270) target = $region56
        $region55: #{tpu_custom_call.1} parent=39 // pred_region
          %v273 = vld [vmem:[%s1] sm:$0x3]
          %274 = vst [vmem:[#allocation2] sm:$0x3] %v273
        $region56: #{tpu_custom_call.1} parent=39 // pred_fallthru
          _
        %v275 = vld [vmem:[#allocation2] sm:$0x3]
        %v276 = vld [vmem:[%s234] sm:$0x3]
        %v277 = vld [vmem:[#allocation6] sm:$0xff]
        %v278 = vld [vmem:[#allocation6 + $0x8] sm:$0xff]
        %v279 = vld [vmem:[#allocation6 + $0x10] sm:$0xff]
        %v280 = vld [vmem:[#allocation6 + $0x18] sm:$0xff]
        %v281 = vld [vmem:[#allocation6 + $0x20] sm:$0xff]
        %v282 = vld [vmem:[#allocation6 + $0x28] sm:$0xff]
        %v283 = vld [vmem:[#allocation6 + $0x30] sm:$0xff]
        %v284 = vld [vmem:[#allocation6 + $0x38] sm:$0xff]
        %v285 = vld [vmem:[#allocation6 + $0x40] sm:$0xff]
        %v286 = vld [vmem:[#allocation6 + $0x48] sm:$0xff]
        %v287 = vld [vmem:[#allocation6 + $0x50] sm:$0xff]
        %v288 = vld [vmem:[#allocation6 + $0x58] sm:$0xff]
        %v289 = vld [vmem:[#allocation6 + $0x60] sm:$0xff]
        %v290 = vld [vmem:[#allocation6 + $0x68] sm:$0xff]
        %v291 = vld [vmem:[#allocation6 + $0x70] sm:$0xff]
        %v292 = vld [vmem:[#allocation6 + $0x78] sm:$0xff]
        %v293 = vld [vmem:[#allocation6 + $0x80] sm:$0xff]
        %v294 = vld [vmem:[#allocation6 + $0x88] sm:$0xff]
        %v295 = vld [vmem:[#allocation6 + $0x90] sm:$0xff]
        %v296 = vld [vmem:[#allocation6 + $0x98] sm:$0xff]
        %v297 = vld [vmem:[#allocation6 + $0xa0] sm:$0xff]
        %v298 = vld [vmem:[#allocation6 + $0xa8] sm:$0xff]
        %v299 = vld [vmem:[#allocation6 + $0xb0] sm:$0xff]
        %v300 = vld [vmem:[#allocation6 + $0xb8] sm:$0xff]
        %v301 = vld [vmem:[#allocation6 + $0xc0] sm:$0xff]
        %v302 = vld [vmem:[#allocation6 + $0xc8] sm:$0xff]
        %v303 = vld [vmem:[#allocation6 + $0xd0] sm:$0xff]
        %v304 = vld [vmem:[#allocation6 + $0xd8] sm:$0xff]
        %v305 = vld [vmem:[#allocation6 + $0xe0] sm:$0xff]
        %v306 = vld [vmem:[#allocation6 + $0xe8] sm:$0xff]
        %v307 = vld [vmem:[%s4] ss:$2 sm:$0x7]
        %v309 = vlaneseq
        %v310 = vshrl.u32 %v309, 7
        %v311 = vsub.s32 0, %v310
        %v312 = vrot.slane %v307, %v311
        %v313 = vlaneseq
        %v314 = vshrl.u32 %v313, 7
        %v315 = vsub.s32 1, %v314
        %v316 = vrot.slane %v307, %v315
        %v317 = vlaneseq
        %v318 = vshrl.u32 %v317, 7
        %v319 = vsub.s32 2, %v318
        %v320 = vrot.slane %v307, %v319
        %vm324 = vcmask 654336
        %v326 = vsel %vm324, %v276, 0
        %328 = vmatprep.subr.mxu0 %v278
        %329 = vmatpush1.msra.mxu0 %v277
        %330 = vmatprep.subr.mxu0 %v281
        %331 = vmatpush1.msra.mxu0 %v280
        %332 = vmatprep.subr.mxu0 %v284
        %333 = vmatpush1.msra.mxu0 %v283
        %334 = vmatprep.subr.mxu0 %v287
        %335 = vmatpush1.msra.mxu0 %v286
        %336 = vmatprep.subr.mxu0 %v290
        %337 = vmatpush1.msra.mxu0 %v289
        %338 = vmatprep.subr.mxu0 %v293
        %339 = vmatpush1.msra.mxu0 %v292
        %340 = vmatprep.subr.mxu0 %v296
        %341 = vmatpush1.msra.mxu0 %v295
        %342 = vmatprep.subr.mxu0 %v299
        %343 = vmatpush1.msra.mxu0 %v298
        %344 = vmatprep.subr.mxu0 %v302
        %345 = vmatpush1.msra.mxu0 %v301
        %346 = vmatprep.subr.mxu0 %v305
        %347 = vmatpush1.msra.mxu0 %v304
        %348 = vmatprep.subr.mxu0 0.0
        %349 = vmatpush1.msra.mxu0 0.0
        %350 = vmatprep.subr.mxu0 0.0
        %351 = vmatpush1.msra.mxu0 0.0
        %352 = vmatprep.subr.mxu0 0.0
        %353 = vmatpush1.msra.mxu0 0.0
        %354 = vmatprep.subr.mxu0 0.0
        %355 = vmatpush1.msra.mxu0 0.0
        %356 = vmatprep.subr.mxu0 0.0
        %357 = vmatpush1.msra.mxu0 0.0
        %358 = vmatprep.subr.mxu0 0.0
        %359 = vmatpush1.msra.mxu0 0.0
        %360 = vmatprep.subr.mxu0 0.0
        %361 = vmatpush1.msra.mxu0 0.0
        %362 = vmatprep.subr.mxu0 0.0
        %363 = vmatpush1.msra.mxu0 0.0
        %364 = vmatprep.subr.mxu0 0.0
        %365 = vmatpush1.msra.mxu0 0.0
        %366 = vmatprep.subr.mxu0 0.0
        %367 = vmatpush1.msra.mxu0 0.0
        %368 = vmatprep.subr.mxu0 0.0
        %369 = vmatpush1.msra.mxu0 0.0
        %370 = vmatprep.subr.mxu0 0.0
        %371 = vmatpush1.msra.mxu0 0.0
        %372 = vmatprep.subr.mxu0 0.0
        %373 = vmatpush1.msra.mxu0 0.0
        %374 = vmatprep.subr.mxu0 0.0
        %375 = vmatpush1.msra.mxu0 0.0
        %376 = vmatprep.subr.mxu0 0.0
        %377 = vmatpush1.msra.mxu0 0.0
        %378 = vmatprep.subr.mxu0 0.0
        %379 = vmatpush1.msra.mxu0 0.0
        %380 = vmatprep.subr.mxu0 0.0
        %381 = vmatpush1.msra.mxu0 0.0
        %382 = vmatprep.subr.mxu0 0.0
        %383 = vmatpush1.msra.mxu0 0.0
        %384 = vmatprep.subr.mxu0 0.0
        %385 = vmatpush1.msra.mxu0 0.0
        %386 = vmatprep.subr.mxu0 0.0
        %387 = vmatpush1.msra.mxu0 0.0
        %388 = vmatprep.subr.mxu0 0.0
        %389 = vmatpush1.msra.mxu0 0.0
        %390 = vmatprep.subr.mxu0 0.0
        %391 = vmatpush1.msra.mxu0 0.0
        %392 = vmatprep.mubr.f32.mxu0 0.0
        %393 = vmatmul.mubr.f32.gmra.mrb[0].mxu0 %v326
        %v394 = vpop.f32.mrb[0].mxu0
        %v395 = vadd.f32 %v312, %v394
        %v396 = vpop.f32.mrb[0].mxu0
        %v397 = vadd.f32 %v316, %v396
        %398 = vdwg.mxu0
        %399 = vmatprep.subr.mxu0 0.0
        %400 = vmatpush1.msra.mxu0 %v279
        %401 = vmatprep.subr.mxu0 0.0
        %402 = vmatpush1.msra.mxu0 %v282
        %403 = vmatprep.subr.mxu0 0.0
        %404 = vmatpush1.msra.mxu0 %v285
        %405 = vmatprep.subr.mxu0 0.0
        %406 = vmatpush1.msra.mxu0 %v288
        %407 = vmatprep.subr.mxu0 0.0
        %408 = vmatpush1.msra.mxu0 %v291
        %409 = vmatprep.subr.mxu0 0.0
        %410 = vmatpush1.msra.mxu0 %v294
        %411 = vmatprep.subr.mxu0 0.0
        %412 = vmatpush1.msra.mxu0 %v297
        %413 = vmatprep.subr.mxu0 0.0
        %414 = vmatpush1.msra.mxu0 %v300
        %415 = vmatprep.subr.mxu0 0.0
        %416 = vmatpush1.msra.mxu0 %v303
        %417 = vmatprep.subr.mxu0 0.0
        %418 = vmatpush1.msra.mxu0 %v306
        %419 = vmatprep.subr.mxu0 0.0
        %420 = vmatpush1.msra.mxu0 0.0
        %421 = vmatprep.subr.mxu0 0.0
        %422 = vmatpush1.msra.mxu0 0.0
        %423 = vmatprep.subr.mxu0 0.0
        %424 = vmatpush1.msra.mxu0 0.0
        %425 = vmatprep.subr.mxu0 0.0
        %426 = vmatpush1.msra.mxu0 0.0
        %427 = vmatprep.subr.mxu0 0.0
        %428 = vmatpush1.msra.mxu0 0.0
        %429 = vmatprep.subr.mxu0 0.0
        %430 = vmatpush1.msra.mxu0 0.0
        %431 = vmatprep.subr.mxu0 0.0
        %432 = vmatpush1.msra.mxu0 0.0
        %433 = vmatprep.subr.mxu0 0.0
        %434 = vmatpush1.msra.mxu0 0.0
        %435 = vmatprep.subr.mxu0 0.0
        %436 = vmatpush1.msra.mxu0 0.0
        %437 = vmatprep.subr.mxu0 0.0
        %438 = vmatpush1.msra.mxu0 0.0
        %439 = vmatprep.subr.mxu0 0.0
        %440 = vmatpush1.msra.mxu0 0.0
        %441 = vmatprep.subr.mxu0 0.0
        %442 = vmatpush1.msra.mxu0 0.0
        %443 = vmatprep.subr.mxu0 0.0
        %444 = vmatpush1.msra.mxu0 0.0
        %445 = vmatprep.subr.mxu0 0.0
        %446 = vmatpush1.msra.mxu0 0.0
        %447 = vmatprep.subr.mxu0 0.0
        %448 = vmatpush1.msra.mxu0 0.0
        %449 = vmatprep.subr.mxu0 0.0
        %450 = vmatpush1.msra.mxu0 0.0
        %451 = vmatprep.subr.mxu0 0.0
        %452 = vmatpush1.msra.mxu0 0.0
        %453 = vmatprep.subr.mxu0 0.0
        %454 = vmatpush1.msra.mxu0 0.0
        %455 = vmatprep.subr.mxu0 0.0
        %456 = vmatpush1.msra.mxu0 0.0
        %457 = vmatprep.subr.mxu0 0.0
        %458 = vmatpush1.msra.mxu0 0.0
        %459 = vmatprep.subr.mxu0 0.0
        %460 = vmatpush1.msra.mxu0 0.0
        %461 = vmatprep.subr.mxu0 0.0
        %462 = vmatpush1.msra.mxu0 0.0
        %463 = vmatprep.mubr.f32.mxu0 0.0
        %464 = vmatmul.mubr.f32.gmra.mrb[0].mxu0 %v326
        %v465 = vpop.f32.mrb[0].mxu0
        %v466 = vadd.f32 %v320, %v465
        %v467 = vpop.f32.mrb[0].mxu0
        %468 = vdwg.mxu0
        %v469 = vld [vmem:[#allocation8] sm:$0xff]
        %v470 = vld [vmem:[#allocation8 + $0x8] sm:$0xff]
        %v471 = vld [vmem:[#allocation8 + $0x10] sm:$0xff]
        %v472 = vld [vmem:[#allocation8 + $0x18] sm:$0xff]
        %v473 = vld [vmem:[#allocation8 + $0x20] sm:$0xff]
        %v474 = vld [vmem:[#allocation8 + $0x28] sm:$0xff]
        %v475 = vld [vmem:[#allocation8 + $0x30] sm:$0xff]
        %v476 = vld [vmem:[#allocation8 + $0x38] sm:$0xff]
        %v477 = vld [vmem:[#allocation8 + $0x40] sm:$0xff]
        %v478 = vld [vmem:[#allocation8 + $0x48] sm:$0xff]
        %v479 = vld [vmem:[#allocation8 + $0x50] sm:$0xff]
        %v480 = vld [vmem:[#allocation8 + $0x58] sm:$0xff]
        %v481 = vld [vmem:[#allocation8 + $0x60] sm:$0xff]
        %v482 = vld [vmem:[#allocation8 + $0x68] sm:$0xff]
        %v483 = vld [vmem:[#allocation8 + $0x70] sm:$0xff]
        %v484 = vld [vmem:[#allocation8 + $0x78] sm:$0xff]
        %v485 = vld [vmem:[#allocation8 + $0x80] sm:$0xff]
        %v486 = vld [vmem:[#allocation8 + $0x88] sm:$0xff]
        %v487 = vld [vmem:[#allocation8 + $0x90] sm:$0xff]
        %v488 = vld [vmem:[#allocation8 + $0x98] sm:$0xff]
        %v489 = vld [vmem:[#allocation8 + $0xa0] sm:$0xff]
        %v490 = vld [vmem:[#allocation8 + $0xa8] sm:$0xff]
        %v491 = vld [vmem:[#allocation8 + $0xb0] sm:$0xff]
        %v492 = vld [vmem:[#allocation8 + $0xb8] sm:$0xff]
        %v493 = vld [vmem:[#allocation8 + $0xc0] sm:$0xff]
        %v494 = vld [vmem:[#allocation8 + $0xc8] sm:$0xff]
        %v495 = vld [vmem:[#allocation8 + $0xd0] sm:$0xff]
        %v496 = vld [vmem:[#allocation8 + $0xd8] sm:$0xff]
        %v497 = vld [vmem:[#allocation8 + $0xe0] sm:$0xff]
        %v498 = vld [vmem:[#allocation8 + $0xe8] sm:$0xff]
        %v499 = vld [vmem:[#allocation8 + $0xf0] sm:$0xff]
        %v500 = vld [vmem:[#allocation8 + $0xf8] sm:$0xff]
        %v501 = vld [vmem:[#allocation8 + $0x100] sm:$0xff]
        %v502 = vld [vmem:[#allocation8 + $0x108] sm:$0xff]
        %v503 = vld [vmem:[#allocation8 + $0x110] sm:$0xff]
        %v504 = vld [vmem:[#allocation8 + $0x118] sm:$0xff]
        %v505 = vld [vmem:[#allocation8 + $0x120] sm:$0xff]
        %v506 = vld [vmem:[#allocation8 + $0x128] sm:$0xff]
        %v507 = vld [vmem:[#allocation8 + $0x130] sm:$0xff]
        %v508 = vld [vmem:[#allocation8 + $0x138] sm:$0xff]
        %v509 = vld [vmem:[#allocation8 + $0x140] sm:$0xff]
        %v510 = vld [vmem:[#allocation8 + $0x148] sm:$0xff]
        %v511 = vld [vmem:[#allocation8 + $0x150] sm:$0xff]
        %v512 = vld [vmem:[#allocation8 + $0x158] sm:$0xff]
        %v513 = vld [vmem:[#allocation8 + $0x160] sm:$0xff]
        %v514 = vld [vmem:[#allocation8 + $0x168] sm:$0xff]
        %v515 = vld [vmem:[#allocation8 + $0x170] sm:$0xff]
        %v516 = vld [vmem:[#allocation8 + $0x178] sm:$0xff]
        %s517 = scalar_lea.vmem %s4, 1
        %v518 = vld [vmem:[%s517] ss:$2 sm:$0x7]
        %v520 = vlaneseq
        %v521 = vshrl.u32 %v520, 7
        %v522 = vsub.s32 0, %v521
        %v523 = vrot.slane %v518, %v522
        %v524 = vlaneseq
        %v525 = vshrl.u32 %v524, 7
        %v526 = vsub.s32 1, %v525
        %v527 = vrot.slane %v518, %v526
        %v528 = vlaneseq
        %v529 = vshrl.u32 %v528, 7
        %v530 = vsub.s32 2, %v529
        %v531 = vrot.slane %v518, %v530
        %535 = vmatprep.subr.mxu0 %v470
        %536 = vmatpush1.msra.mxu0 %v469
        %537 = vmatprep.subr.mxu0 %v473
        %538 = vmatpush1.msra.mxu0 %v472
        %539 = vmatprep.subr.mxu0 %v476
        %540 = vmatpush1.msra.mxu0 %v475
        %541 = vmatprep.subr.mxu0 %v479
        %542 = vmatpush1.msra.mxu0 %v478
        %543 = vmatprep.subr.mxu0 %v482
        %544 = vmatpush1.msra.mxu0 %v481
        %545 = vmatprep.subr.mxu0 %v485
        %546 = vmatpush1.msra.mxu0 %v484
        %547 = vmatprep.subr.mxu0 %v488
        %548 = vmatpush1.msra.mxu0 %v487
        %549 = vmatprep.subr.mxu0 %v491
        %550 = vmatpush1.msra.mxu0 %v490
        %551 = vmatprep.subr.mxu0 %v494
        %552 = vmatpush1.msra.mxu0 %v493
        %553 = vmatprep.subr.mxu0 %v497
        %554 = vmatpush1.msra.mxu0 %v496
        %555 = vmatprep.subr.mxu0 %v500
        %556 = vmatpush1.msra.mxu0 %v499
        %557 = vmatprep.subr.mxu0 %v503
        %558 = vmatpush1.msra.mxu0 %v502
        %559 = vmatprep.subr.mxu0 %v506
        %560 = vmatpush1.msra.mxu0 %v505
        %561 = vmatprep.subr.mxu0 %v509
        %562 = vmatpush1.msra.mxu0 %v508
        %563 = vmatprep.subr.mxu0 %v512
        %564 = vmatpush1.msra.mxu0 %v511
        %565 = vmatprep.subr.mxu0 %v515
        %566 = vmatpush1.msra.mxu0 %v514
        %567 = vmatprep.subr.mxu0 0.0
        %568 = vmatpush1.msra.mxu0 0.0
        %569 = vmatprep.subr.mxu0 0.0
        %570 = vmatpush1.msra.mxu0 0.0
        %571 = vmatprep.subr.mxu0 0.0
        %572 = vmatpush1.msra.mxu0 0.0
        %573 = vmatprep.subr.mxu0 0.0
        %574 = vmatpush1.msra.mxu0 0.0
        %575 = vmatprep.subr.mxu0 0.0
        %576 = vmatpush1.msra.mxu0 0.0
        %577 = vmatprep.subr.mxu0 0.0
        %578 = vmatpush1.msra.mxu0 0.0
        %579 = vmatprep.subr.mxu0 0.0
        %580 = vmatpush1.msra.mxu0 0.0
        %581 = vmatprep.subr.mxu0 0.0
        %582 = vmatpush1.msra.mxu0 0.0
        %583 = vmatprep.subr.mxu0 0.0
        %584 = vmatpush1.msra.mxu0 0.0
        %585 = vmatprep.subr.mxu0 0.0
        %586 = vmatpush1.msra.mxu0 0.0
        %587 = vmatprep.subr.mxu0 0.0
        %588 = vmatpush1.msra.mxu0 0.0
        %589 = vmatprep.subr.mxu0 0.0
        %590 = vmatpush1.msra.mxu0 0.0
        %591 = vmatprep.subr.mxu0 0.0
        %592 = vmatpush1.msra.mxu0 0.0
        %593 = vmatprep.subr.mxu0 0.0
        %594 = vmatpush1.msra.mxu0 0.0
        %595 = vmatprep.subr.mxu0 0.0
        %596 = vmatpush1.msra.mxu0 0.0
        %597 = vmatprep.subr.mxu0 0.0
        %598 = vmatpush1.msra.mxu0 0.0
        %599 = vmatprep.mubr.f32.mxu0 0.0
        %600 = vmatmul.mubr.f32.gmra.mrb[0].mxu0 %v275
        %v601 = vpop.f32.mrb[0].mxu0
        %v602 = vadd.f32 %v523, %v601
        %v603 = vpop.f32.mrb[0].mxu0
        %v604 = vadd.f32 %v527, %v603
        %605 = vdwg.mxu0
        %606 = vmatprep.subr.mxu0 0.0
        %607 = vmatpush1.msra.mxu0 %v471
        %608 = vmatprep.subr.mxu0 0.0
        %609 = vmatpush1.msra.mxu0 %v474
        %610 = vmatprep.subr.mxu0 0.0
        %611 = vmatpush1.msra.mxu0 %v477
        %612 = vmatprep.subr.mxu0 0.0
        %613 = vmatpush1.msra.mxu0 %v480
        %614 = vmatprep.subr.mxu0 0.0
        %615 = vmatpush1.msra.mxu0 %v483
        %616 = vmatprep.subr.mxu0 0.0
        %617 = vmatpush1.msra.mxu0 %v486
        %618 = vmatprep.subr.mxu0 0.0
        %619 = vmatpush1.msra.mxu0 %v489
        %620 = vmatprep.subr.mxu0 0.0
        %621 = vmatpush1.msra.mxu0 %v492
        %622 = vmatprep.subr.mxu0 0.0
        %623 = vmatpush1.msra.mxu0 %v495
        %624 = vmatprep.subr.mxu0 0.0
        %625 = vmatpush1.msra.mxu0 %v498
        %626 = vmatprep.subr.mxu0 0.0
        %627 = vmatpush1.msra.mxu0 %v501
        %628 = vmatprep.subr.mxu0 0.0
        %629 = vmatpush1.msra.mxu0 %v504
        %630 = vmatprep.subr.mxu0 0.0
        %631 = vmatpush1.msra.mxu0 %v507
        %632 = vmatprep.subr.mxu0 0.0
        %633 = vmatpush1.msra.mxu0 %v510
        %634 = vmatprep.subr.mxu0 0.0
        %635 = vmatpush1.msra.mxu0 %v513
        %636 = vmatprep.subr.mxu0 0.0
        %637 = vmatpush1.msra.mxu0 %v516
        %638 = vmatprep.subr.mxu0 0.0
        %639 = vmatpush1.msra.mxu0 0.0
        %640 = vmatprep.subr.mxu0 0.0
        %641 = vmatpush1.msra.mxu0 0.0
        %642 = vmatprep.subr.mxu0 0.0
        %643 = vmatpush1.msra.mxu0 0.0
        %644 = vmatprep.subr.mxu0 0.0
        %645 = vmatpush1.msra.mxu0 0.0
        %646 = vmatprep.subr.mxu0 0.0
        %647 = vmatpush1.msra.mxu0 0.0
        %648 = vmatprep.subr.mxu0 0.0
        %649 = vmatpush1.msra.mxu0 0.0
        %650 = vmatprep.subr.mxu0 0.0
        %651 = vmatpush1.msra.mxu0 0.0
        %652 = vmatprep.subr.mxu0 0.0
        %653 = vmatpush1.msra.mxu0 0.0
        %654 = vmatprep.subr.mxu0 0.0
        %655 = vmatpush1.msra.mxu0 0.0
        %656 = vmatprep.subr.mxu0 0.0
        %657 = vmatpush1.msra.mxu0 0.0
        %658 = vmatprep.subr.mxu0 0.0
        %659 = vmatpush1.msra.mxu0 0.0
        %660 = vmatprep.subr.mxu0 0.0
        %661 = vmatpush1.msra.mxu0 0.0
        %662 = vmatprep.subr.mxu0 0.0
        %663 = vmatpush1.msra.mxu0 0.0
        %664 = vmatprep.subr.mxu0 0.0
        %665 = vmatpush1.msra.mxu0 0.0
        %666 = vmatprep.subr.mxu0 0.0
        %667 = vmatpush1.msra.mxu0 0.0
        %668 = vmatprep.subr.mxu0 0.0
        %669 = vmatpush1.msra.mxu0 0.0
        %670 = vmatprep.mubr.f32.mxu0 0.0
        %671 = vmatmul.mubr.f32.gmra.mrb[0].mxu0 %v275
        %v672 = vpop.f32.mrb[0].mxu0
        %v673 = vadd.f32 %v531, %v672
        %v674 = vpop.f32.mrb[0].mxu0
        %675 = vdwg.mxu0
        %v676 = vadd.f32 %v395, %v602
        %v677 = vxor.u32 %v676, 2147483648
        %v678 = vmul.f32 %v677, 1.442695
        %v679 = vpow.pop %v678
        %v680 = vadd.f32 %v679, 1.0
        %v681 = vrcp.pop %v680
        %v682 = vmul.f32 1.0, %v681
        %v683 = vadd.f32 %v397, %v604
        %v684 = vxor.u32 %v683, 2147483648
        %v685 = vmul.f32 %v684, 1.442695
        %v686 = vpow.pop %v685
        %v687 = vadd.f32 %v686, 1.0
        %v688 = vrcp.pop %v687
        %v689 = vmul.f32 1.0, %v688
        %v690 = vmul.f32 %v682, %v673
        %v691 = vadd.f32 %v466, %v690
        %v692 = vtanh.pop %v691
        %v693 = vsub.f32 1.0, %v689
        %v694 = vmul.f32 %v693, %v692
        %v695 = vmul.f32 %v689, %v275
        %v696 = vadd.f32 %v694, %v695
        %697 = vst [vmem:[#allocation2] sm:$0x3] %v696
        %698 = vst [vmem:[%s268] sm:$0x3] %v696
        %s699 = sand.u32 %s141, 1
        %s700 = scalar_lea.sflag [#allocation5], %s699
        %s701 = sand.u32 %s141, 1
        %s702 = smul.addr %s701, 2
        %s703 = scalar_lea.vmem [#allocation9], %s702
        // Predicated region
        $region57: #{tpu_custom_call.1} parent=39 // pred_check
          %p704 = pneg %p151
        $region58: #{tpu_custom_call.1} parent=39 // pred_check_branch
          %706 = sbr.rel (%p704) target = $region60
        $region59: #{tpu_custom_call.1} parent=39 // pred_region
          %s708 = ssub.s32 32, 32
          %709 = vsyncadd %s700, %s708
          %s710 = smul.addr %s23, 32
          %s711 = scalar_lea.hbm %s5, %s710
          %s713 = sshll.u32 %s703, 4
          %s714 = int_to_ptr.vmem [resolvable:$true] %s713
          %716 = dma.vmem_to_hbm [thread:$0]  %s714, 32, %s711, %s700
        $region60: #{tpu_custom_call.1} parent=39 // pred_fallthru
          _
      $region40: #{tpu_custom_call.1} parent=5 // pred_fallthru
        _
      %p717 = scmp.le.s32.totalorder 2, %s18
      // Predicated region
      $region61: #{tpu_custom_call.1} parent=5 // pred_check
        %p718 = pneg %p717
      $region62: #{tpu_custom_call.1} parent=5 // pred_check_branch
        %720 = sbr.rel (%p718) target = $region64
      $region63: #{tpu_custom_call.1} parent=5 // pred_region
        %s721 = ssub.s32 %s18, 2
        // Predicated region
        $region65: #{tpu_custom_call.1} parent=63 // pred_check
          %p722 = pneg %p157
        $region66: #{tpu_custom_call.1} parent=63 // pred_check_branch
          %724 = sbr.rel (%p722) target = $region68
        $region67: #{tpu_custom_call.1} parent=63 // pred_region
          %s725 = sand.u32 %s142, 1
          %s726 = scalar_lea.sflag [#allocation5], %s725
          %s727 = sand.u32 %s142, 1
          %s728 = smul.addr %s727, 2
          %s729 = scalar_lea.vmem [#allocation9], %s728
          %730 = dma.done %s726, 32
        $region68: #{tpu_custom_call.1} parent=63 // pred_fallthru
          _
      $region64: #{tpu_custom_call.1} parent=5 // pred_fallthru
        _
    $region6: #{tpu_custom_call.1} parent=1 // loop_footer
      %s22 = sadd.s32 1, %s18
    $region7: #{tpu_custom_call.1} parent=1 // loop_footer_branch
      %17 = sbr.rel target = $region3
    $region8: #{tpu_custom_call.1} parent=1 // loop_exit
      _
    %731 = vsyncpa [#allocation4], 1
    %s732 = scalar_lea.sflag [#allocation4], 1
    %733 = vsyncpa %s732, 1
    %734 = vsyncpa [#allocation7], 1
    %735 = vsyncpa [#allocation5], 1
    %s736 = scalar_lea.sflag [#allocation5], 1
    %737 = vsyncpa %s736, 1

</llo_original>
